<compile_context>
chip_gen: v7x
topology: tpu7x:2x2x1
jax: 0.10.0
libtpu: 0.0.40
codegen_flags: <defaults>
</compile_context>

<pallas_src>
import functools

import jax
import jax.numpy as jnp
from jax.experimental import pallas as pl
from jax.experimental.pallas import tpu as pltpu


def _norm_reduce_kernel(x_ref, o_ref, acc_ref, *, inv_c):
    """Accumulate sum(|x|) over the channel axis, finalize as mean."""
    c_idx = pl.program_id(2)  # innermost "arbitrary" (reduction) axis

    @pl.when(c_idx == 0)
    def _init():
        acc_ref[...] = jnp.zeros_like(acc_ref)

    x = x_ref[...].astype(jnp.float32)            # (1, c_tile, tile_h, W)
    acc_ref[...] += jnp.sum(jnp.abs(x), axis=1)   # VPU abs + adds -> (1, tile_h, W)

    @pl.when(c_idx == pl.num_programs(2) - 1)
    def _finalize():
        o_ref[...] = (acc_ref[...] * inv_c).astype(o_ref.dtype)


def _largest_divisor_leq(n, limit):
    limit = max(1, min(n, limit))
    for d in range(limit, 0, -1):
        if n % d == 0:
            return d
    return 1


def _choose_tiling(B, C, H, W, budget_bytes=8 << 20):
    """Pick (c_tile, tile_h); budget is against the f32 working set (4 B/elem)."""
    row_f32 = W * 4
    if C * H * row_f32 <= budget_bytes:
        # 1) Whole (C, H, W) plane per batch: contiguous DMA, fewest grid steps.
        c_tile, tile_h = C, H
    else:
        # 2) Keep C whole, tile H in sublane multiples of 8.
        th = (budget_bytes // (C * row_f32)) // 8 * 8
        if th >= 8:
            c_tile, tile_h = C, min(th, H)
        else:
            # 3) Large-C fallback: tile C along an inner reduction grid axis.
            #    c_tile is a divisor of C so the reduction has no ragged tail.
            tile_h = H if H <= 8 else 8
            c_limit = budget_bytes // (tile_h * row_f32)
            c_tile = _largest_divisor_leq(C, c_limit)

    # v7x megacore balance: make sure the "parallel" axes carry >= 2 steps.
    if B * pl.cdiv(H, tile_h) < 2 and H >= 16:
        tile_h = max(8, ((H // 2) // 8) * 8)

    return c_tile, tile_h


def norm_reducer(x, dim=1):
    """Pallas implementation of NormReducer(dim=1) for 4-D NCHW inputs."""
    assert x.ndim == 4 and dim == 1, "this kernel implements dim=1 on 4D input"
    assert jnp.issubdtype(x.dtype, jnp.floating), "floating-point input required"
    B, C, H, W = x.shape

    c_tile, tile_h = _choose_tiling(B, C, H, W)
    num_h = pl.cdiv(H, tile_h)
    num_c = pl.cdiv(C, c_tile)  # c_tile always divides C -> exact

    kernel = functools.partial(_norm_reduce_kernel, inv_c=1.0 / C)

    itemsize = jnp.dtype(x.dtype).itemsize
    cost = pl.CostEstimate(
        flops=2 * B * C * H * W,  # abs + accumulate
        transcendentals=0,
        bytes_accessed=B * C * H * W * itemsize + B * H * W * itemsize,
    )

    out = pl.pallas_call(
        kernel,
        out_shape=jax.ShapeDtypeStruct((B, H, W), x.dtype),
        grid=(B, num_h, num_c),
        in_specs=[
            pl.BlockSpec((1, c_tile, tile_h, W), lambda b, h, c: (b, c, h, 0)),
        ],
        out_specs=pl.BlockSpec((1, tile_h, W), lambda b, h, c: (b, h, 0)),
        scratch_shapes=[pltpu.VMEM((1, tile_h, W), jnp.float32)],
        compiler_params=pltpu.CompilerParams(
            dimension_semantics=("parallel", "parallel", "arbitrary"),
            # ~8 MiB f32-equivalent tiles, double-buffered, plus in-kernel f32
            # temporaries stay <= ~32 MiB; 48 MiB leaves headroom on v7x
            # (64 MiB physical) and is trivially fine on v5e/v6e.
            vmem_limit_bytes=48 << 20,
        ),
        cost_estimate=cost,
    )(x)

    return out


if __name__ == "__main__":
    key = jax.random.PRNGKey(0)
    B, C, H, W = 2, 4, 16, 16
    x = jax.random.normal(key, (B, C, H, W), dtype=jnp.float32)

    out = norm_reducer(x, dim=1)
    out = jax.block_until_ready(out)

    # Reference check (plain JAX, mirrors torch x.abs().mean(1)).
    ref = jnp.mean(jnp.abs(x), axis=1)
    assert out.shape == ref.shape == (B, H, W)
    assert jnp.allclose(out, ref, atol=1e-6, rtol=1e-6)

    print("KERNEL_OK")
</pallas_src>

<mosaic_0001>
module attributes {stable_mosaic.version = 11 : i64} {
  func.func @_norm_reduce_kernel(%arg0: i32, %arg1: i32, %arg2: i32, %arg3: memref<1x4x16x16xf32, #tpu.memory_space<vmem>>, %arg4: memref<1x16x16xf32, #tpu.memory_space<vmem>>, %arg5: memref<1x16x16xf32, #tpu.memory_space<vmem>>) attributes {dimension_semantics = [#tpu.dimension_semantics<parallel>, #tpu.dimension_semantics<parallel>, #tpu.dimension_semantics<arbitrary>], iteration_bounds = array<i64: 2, 1, 1>, scalar_prefetch = 0 : i64, scratch_operands = 1 : i64, tpu.core_type = #tpu.core_type<tc>, window_params = [{transform_indices = @transform_0, window_bounds = array<i64: 1, 4, 16, 16>}, {transform_indices = @transform_1, window_bounds = array<i64: 1, 16, 16>}]} {
    %c0_i32 = arith.constant 0 : i32
    %0 = arith.cmpi eq, %arg2, %c0_i32 : i32
    %1 = arith.extui %0 : i1 to i32
    %c0_i32_0 = arith.constant 0 : i32
    %2 = arith.cmpi ne, %1, %c0_i32_0 : i32
    scf.if %2 {
      %cst_12 = arith.constant 0.000000e+00 : f32
      %12 = vector.broadcast %cst_12 : f32 to vector<1x16x16xf32>
      %c0_13 = arith.constant 0 : index
      %c0_14 = arith.constant 0 : index
      %c0_15 = arith.constant 0 : index
      %13 = vector.load %arg5[%c0_13, %c0_14, %c0_15] : memref<1x16x16xf32, #tpu.memory_space<vmem>>, vector<1x16x16xf32>
      tpu.vector_store %arg5[%c0_13, %c0_14, %c0_15], %12 {strides = array<i32>} : memref<1x16x16xf32, #tpu.memory_space<vmem>>, vector<1x16x16xf32>,
    } else {
    }
    %c0 = arith.constant 0 : index
    %c0_1 = arith.constant 0 : index
    %c0_2 = arith.constant 0 : index
    %c0_3 = arith.constant 0 : index
    %3 = vector.load %arg3[%c0, %c0_1, %c0_2, %c0_3] : memref<1x4x16x16xf32, #tpu.memory_space<vmem>>, vector<1x4x16x16xf32>
    %c0_4 = arith.constant 0 : index
    %c0_5 = arith.constant 0 : index
    %c0_6 = arith.constant 0 : index
    %4 = vector.load %arg5[%c0_4, %c0_5, %c0_6] : memref<1x16x16xf32, #tpu.memory_space<vmem>>, vector<1x16x16xf32>
    %5 = math.absf %3 : vector<1x4x16x16xf32>
    %cst = arith.constant dense<0.000000e+00> : vector<1x16x16xf32>
    %6 = vector.multi_reduction <add>, %5, %cst [1] : vector<1x4x16x16xf32> to vector<1x16x16xf32>
    %7 = arith.addf %4, %6 : vector<1x16x16xf32>
    %c0_7 = arith.constant 0 : index
    %c0_8 = arith.constant 0 : index
    %c0_9 = arith.constant 0 : index
    %8 = vector.load %arg5[%c0_7, %c0_8, %c0_9] : memref<1x16x16xf32, #tpu.memory_space<vmem>>, vector<1x16x16xf32>
    tpu.vector_store %arg5[%c0_7, %c0_8, %c0_9], %7 {strides = array<i32>} : memref<1x16x16xf32, #tpu.memory_space<vmem>>, vector<1x16x16xf32>,
    %c0_i32_10 = arith.constant 0 : i32
    %9 = arith.cmpi eq, %arg2, %c0_i32_10 : i32
    %10 = arith.extui %9 : i1 to i32
    %c0_i32_11 = arith.constant 0 : i32
    %11 = arith.cmpi ne, %10, %c0_i32_11 : i32
    scf.if %11 {
      %c0_12 = arith.constant 0 : index
      %c0_13 = arith.constant 0 : index
      %c0_14 = arith.constant 0 : index
      %12 = vector.load %arg5[%c0_12, %c0_13, %c0_14] : memref<1x16x16xf32, #tpu.memory_space<vmem>>, vector<1x16x16xf32>
      %cst_15 = arith.constant 2.500000e-01 : f32
      %13 = vector.broadcast %cst_15 : f32 to vector<1x16x16xf32>
      %14 = arith.mulf %12, %13 : vector<1x16x16xf32>
      %c0_16 = arith.constant 0 : index
      %c0_17 = arith.constant 0 : index
      %c0_18 = arith.constant 0 : index
      %15 = vector.load %arg4[%c0_16, %c0_17, %c0_18] : memref<1x16x16xf32, #tpu.memory_space<vmem>>, vector<1x16x16xf32>
      tpu.vector_store %arg4[%c0_16, %c0_17, %c0_18], %14 {strides = array<i32>} : memref<1x16x16xf32, #tpu.memory_space<vmem>>, vector<1x16x16xf32>,
    } else {
    }
    return
  }
  func.func @transform_0(%arg0: i32, %arg1: i32, %arg2: i32) -> (i32, i32, i32, i32) {
    %c0_i32 = arith.constant 0 : i32
    %c0_i32_0 = arith.constant 0 : i32
    return %arg0, %arg2, %arg1, %c0_i32 : i32, i32, i32, i32
  }
  func.func @transform_1(%arg0: i32, %arg1: i32, %arg2: i32) -> (i32, i32, i32) {
    %c0_i32 = arith.constant 0 : i32
    %c0_i32_0 = arith.constant 0 : i32
    return %arg0, %arg1, %c0_i32 : i32, i32, i32
  }
}

</mosaic_0001>

<llo_original>
// kernel: tpu_custom_call.1
$region0: #{tpu_custom_call.1}
  #allocation0 [shape = 'u32[]', space=smem, size = 0x4, offset = 0x4, fixed_abs, tag = 'smem constant byte address 0x4 - core index']
  #allocation1 [shape = 'u32[144,128]{1,0:T(1,128)}', space=vmem, size = 0x12000, scoped, tag = 'internal scratch']
  #allocation2 [shape = 'f32[1,16,16]{2,1,0:T(8,128)}', space=vmem, size = 0x2000, scoped, tag = 'scratch operand']
  %s0 = inlined_call_operand.hbm [shape: f32[2,4,16,16], index: 0, kind: input, shape index: {}]
  %s1 = inlined_call_operand.hbm [shape: f32[2,16,16], index: 1, kind: output, shape index: {}]
  %s2 = sld [smem:[#allocation0]]
  $region49: #{tpu_custom_call.1} parent=0
    _
  %s4 = ssub.s32 1, %s2
  %s5 = scalar_select 0, %s4, %s2
  $region1: #{tpu_custom_call.1} parent=0
    #allocation3 [shape = 'u8[65536]{0}', space=vmem, size = 0x10000, scoped, tag = 'input window, operand 0']
    #allocation4 [shape = 's32[2]{0}', space=sflag, size = 0x8, scoped, tag = 'scoped memory for tpu_custom_call.1']
    #allocation5 [shape = 's32[2]{0}', space=sflag, size = 0x8, scoped, tag = 'scoped memory for tpu_custom_call.1']
    #allocation6 [shape = 'u8[16384]{0}', space=vmem, size = 0x4000, scoped, tag = 'output window, operand 0']
    %6 = vsyncpa [#allocation4], 0
    %s7 = scalar_lea.sflag [#allocation4], 1
    %8 = vsyncpa %s7, 0
    %9 = vsyncpa [#allocation5], 0
    %s10 = scalar_lea.sflag [#allocation5], 1
    %11 = vsyncpa %s10, 0
    loop: start=0, step=1, limit=4
    $region2: #{tpu_custom_call.1} parent=1 // loop_pre_header
      _
    $region3: #{tpu_custom_call.1} parent=1 // loop_header
      %s13 = sphi 0, %s17
      %p14 = scmp.ge.s32.totalorder %s13, 4
      %s20 = sphi 0, %s39
      %s21 = sphi 0, %s35
      %s22 = sphi 0, %s31
      %s23 = sphi 0, %s20
      %s24 = sphi 0, %s21
      %s25 = sphi 0, %s22
      %s26 = sphi 0, %s23
      %s27 = sphi 0, %s24
      %s28 = sphi 0, %s25
      %s46 = sphi 0, %s48
      %s49 = sphi 0, %s46
      %s50 = sphi 0, %s49
      %s66 = sphi 0, %s50
      %s74 = sphi 0, %s76
      %s77 = sphi 0, %s74
      %s78 = sphi 0, %s77
      %s94 = sphi 0, %s78
    $region4: #{tpu_custom_call.1} parent=1 // loop_header_branch
      %16 = sbr.rel (%p14) target = $region8
    $region5: #{tpu_custom_call.1} parent=1 // loop_body
      %s18 = ssub.s32 %s13, 1
      %s19 = ssub.s32 %s13, 2
      %s29 = sadd.s32 1, %s22
      %p30 = scmp.ge.s32.totalorder %s29, 1
      %s31 = scalar_select %p30, 0, %s29
      %s32 = sadd.s32 1, %s21
      %s33 = scalar_select %p30, %s32, %s21
      %p34 = scmp.ge.s32.totalorder %s33, 1
      %s35 = scalar_select %p34, 0, %s33
      %s36 = sadd.s32 1, %s20
      %s37 = scalar_select %p34, %s36, %s20
      %p38 = scmp.ge.s32.totalorder %s37, 2
      %s39 = scalar_select %p38, 0, %s37
      %s40 = ssub.s32 %s20, %s39
      %s41 = ssub.s32 %s22, %s31
      %s42 = sor.u32 %s40, %s41
      %s43 = ssub.s32 %s21, %s35
      %s44 = sor.u32 %s42, %s43
      %p45 = scmp.eq.s32.totalorder %s44, 0
      %s47 = sadd.s32 %s46, 1
      %s48 = scalar_select %p45, %s46, %s47
      %p51 = pneg %p45
      %p52 = scmp.eq.s32.totalorder %s13, 1
      %p53 = por %p51, %p52
      %p54 = scmp.ne.s32.totalorder %s46, %s49
      %p55 = scmp.eq.s32.totalorder %s13, 0
      %p56 = por %p54, %p55
      %p57 = scmp.ne.s32.totalorder %s46, %s49
      %p58 = scmp.eq.s32.totalorder %s18, 1
      %p59 = por %p57, %p58
      %p60 = scmp.ne.s32.totalorder %s49, %s50
      %p61 = scmp.eq.s32.totalorder %s18, 0
      %p62 = por %p60, %p61
      %p63 = scmp.ne.s32.totalorder %s49, %s50
      %p64 = scmp.eq.s32.totalorder %s19, 1
      %p65 = por %p63, %p64
      %p67 = scmp.ne.s32.totalorder %s50, %s66
      %p68 = scmp.eq.s32.totalorder %s19, 0
      %p69 = por %p67, %p68
      %s70 = ssub.s32 %s20, %s39
      %s71 = ssub.s32 %s21, %s35
      %s72 = sor.u32 %s70, %s71
      %p73 = scmp.eq.s32.totalorder %s72, 0
      %s75 = sadd.s32 %s74, 1
      %s76 = scalar_select %p73, %s74, %s75
      %p79 = pneg %p73
      %p80 = scmp.eq.s32.totalorder %s13, 1
      %p81 = por %p79, %p80
      %p82 = scmp.ne.s32.totalorder %s74, %s77
      %p83 = scmp.eq.s32.totalorder %s13, 0
      %p84 = por %p82, %p83
      %p85 = scmp.ne.s32.totalorder %s74, %s77
      %p86 = scmp.eq.s32.totalorder %s18, 1
      %p87 = por %p85, %p86
      %p88 = scmp.ne.s32.totalorder %s77, %s78
      %p89 = scmp.eq.s32.totalorder %s18, 0
      %p90 = por %p88, %p89
      %p91 = scmp.ne.s32.totalorder %s77, %s78
      %p92 = scmp.eq.s32.totalorder %s19, 1
      %p93 = por %p91, %p92
      %p95 = scmp.ne.s32.totalorder %s78, %s94
      %p96 = scmp.eq.s32.totalorder %s19, 0
      %p97 = por %p95, %p96
      %p98 = scmp.le.s32.totalorder 1, %s13
      %p99 = scmp.lt.s32.totalorder %s13, 3
      %p100 = pnand %p98, %p99
      %p101 = pneg %p100
      // Predicated region
      $region9: #{tpu_custom_call.1} parent=5 // pred_check
        _
      $region10: #{tpu_custom_call.1} parent=5 // pred_check_branch
        %103 = sbr.rel (%p100) target = $region12
      $region11: #{tpu_custom_call.1} parent=5 // pred_region
        %s104 = ssub.s32 %s13, 1
      $region12: #{tpu_custom_call.1} parent=5 // pred_fallthru
        _
      %p105 = scmp.lt.s32.totalorder %s13, 2
      // Predicated region
      $region13: #{tpu_custom_call.1} parent=5 // pred_check
        %p106 = pneg %p105
      $region14: #{tpu_custom_call.1} parent=5 // pred_check_branch
        %108 = sbr.rel (%p106) target = $region16
      $region15: #{tpu_custom_call.1} parent=5 // pred_region
        // Predicated region
        $region17: #{tpu_custom_call.1} parent=15 // pred_check
          %p109 = pneg %p56
        $region18: #{tpu_custom_call.1} parent=15 // pred_check_branch
          %111 = sbr.rel (%p109) target = $region20
        $region19: #{tpu_custom_call.1} parent=15 // pred_region
          %s112 = sand.u32 %s46, 1
          %s113 = scalar_lea.sflag [#allocation4], %s112
          %s114 = sand.u32 %s46, 1
          %s115 = smul.addr %s114, 64
          %s116 = scalar_lea.vmem [#allocation3], %s115
          %s117 = smul.u32 4, %s22
          %s118 = smul.u32 2, %s21
          %s120 = ssub.s32 1024, 1024
          %121 = vsyncadd %s113, %s120
          %s122 = smul.addr %s117, 2
          %s123 = sadd.s32 %s118, %s122
          %s124 = smul.addr %s20, 8
          %s125 = sadd.s32 %s123, %s124
          %s126 = smul.addr %s125, 128
          %s127 = scalar_lea.hbm %s0, %s126
          %s128 = sshll.u32 %s116, 4
          %s129 = int_to_ptr.vmem [resolvable:$true] %s128
          %134 = dma.hbm_to_vmem [thread:$0]  %s127, 1024, %s129, %s113, 128, 128, 8
        $region20: #{tpu_custom_call.1} parent=15 // pred_fallthru
          _
      $region16: #{tpu_custom_call.1} parent=5 // pred_fallthru
        _
      %p135 = scmp.le.s32.totalorder 1, %s13
      %p136 = scmp.lt.s32.totalorder %s13, 3
      %p137 = pnand %p135, %p136
      %p138 = pneg %p137
      // Predicated region
      $region21: #{tpu_custom_call.1} parent=5 // pred_check
        _
      $region22: #{tpu_custom_call.1} parent=5 // pred_check_branch
        %140 = sbr.rel (%p137) target = $region24
      $region23: #{tpu_custom_call.1} parent=5 // pred_region
        %s141 = ssub.s32 %s13, 1
        %s142 = sand.u32 %s49, 1
        %s143 = scalar_lea.sflag [#allocation4], %s142
        %s144 = sand.u32 %s49, 1
        %s145 = smul.addr %s144, 64
        %s146 = scalar_lea.vmem [#allocation3], %s145
        // Predicated region
        $region25: #{tpu_custom_call.1} parent=23 // pred_check
          %p147 = pneg %p62
        $region26: #{tpu_custom_call.1} parent=23 // pred_check_branch
          %149 = sbr.rel (%p147) target = $region28
        $region27: #{tpu_custom_call.1} parent=23 // pred_region
          %150 = dma.done %s143, 1024
        $region28: #{tpu_custom_call.1} parent=23 // pred_fallthru
          _
        %s151 = sand.u32 %s49, 1
        %s152 = scalar_lea.sflag [#allocation4], %s151
        %s153 = sand.u32 %s49, 1
        %s154 = smul.addr %s153, 64
        %s155 = scalar_lea.vmem [#allocation3], %s154
        %p156 = pneg %p62
        %p157 = pneg %p59
        %p158 = pneg %p90
        %p159 = pneg %p87
        %s160 = sand.u32 %s77, 1
        %s161 = scalar_lea.sflag [#allocation5], %s160
        %s162 = sand.u32 %s77, 1
        %s163 = smul.addr %s162, 16
        %s164 = scalar_lea.vmem [#allocation6], %s163
        %s165 = smul.u32 4, %s25
        %s166 = smul.u32 2, %s24
        %s167 = smul.u32 2, %s24
        %p168 = scmp.eq.s32.totalorder %s25, 0
        // Predicated region
        $region29: #{tpu_custom_call.1} parent=23 // pred_check
          %p169 = pneg %p168
        $region30: #{tpu_custom_call.1} parent=23 // pred_check_branch
          %171 = sbr.rel (%p169) target = $region32
        $region31: #{tpu_custom_call.1} parent=23 // pred_region
          %vm172 = vcmask 130048
          %173 = vst.msk [vmem:[#allocation2] sm:$0xff] %vm172, 0.0
          %174 = vst.msk [vmem:[#allocation2 + $0x8] sm:$0xff] %vm172, 0.0
        $region32: #{tpu_custom_call.1} parent=23 // pred_fallthru
          _
        %v175 = vld [vmem:[%s146] sm:$0xff]
        %v176 = vld [vmem:[%s146 + $0x8] sm:$0xff]
        %v177 = vld [vmem:[%s146 + $0x10] sm:$0xff]
        %v178 = vld [vmem:[%s146 + $0x18] sm:$0xff]
        %v179 = vld [vmem:[%s146 + $0x20] sm:$0xff]
        %v180 = vld [vmem:[%s146 + $0x28] sm:$0xff]
        %v181 = vld [vmem:[%s146 + $0x30] sm:$0xff]
        %v182 = vld [vmem:[%s146 + $0x38] sm:$0xff]
        %v183 = vld [vmem:[#allocation2] sm:$0xff]
        %v184 = vld [vmem:[#allocation2 + $0x8] sm:$0xff]
        %v185 = vand.u32 2147483647, %v175
        %v186 = vand.u32 2147483647, %v176
        %v187 = vand.u32 2147483647, %v177
        %v188 = vand.u32 2147483647, %v178
        %v189 = vand.u32 2147483647, %v179
        %v190 = vand.u32 2147483647, %v180
        %v191 = vand.u32 2147483647, %v181
        %v192 = vand.u32 2147483647, %v182
        %vm193 = vcmask 130048
        %v194 = vsel %vm193, %v185, 0.0
        %v195 = vsel %vm193, %v187, 0.0
        %v196 = vadd.f32 %v194, %v195
        %v197 = vsel %vm193, %v189, 0.0
        %v198 = vadd.f32 %v196, %v197
        %v199 = vsel %vm193, %v191, 0.0
        %v200 = vadd.f32 %v198, %v199
        %v201 = vsel %vm193, %v186, 0.0
        %v202 = vsel %vm193, %v188, 0.0
        %v203 = vadd.f32 %v201, %v202
        %v204 = vsel %vm193, %v190, 0.0
        %v205 = vadd.f32 %v203, %v204
        %v206 = vsel %vm193, %v192, 0.0
        %v207 = vadd.f32 %v205, %v206
        %v208 = vadd.f32 %v183, %v200
        %v209 = vadd.f32 %v184, %v207
        %210 = vst.msk [vmem:[#allocation2] sm:$0xff] %vm193, %v208
        %211 = vst.msk [vmem:[#allocation2 + $0x8] sm:$0xff] %vm193, %v209
        // Predicated region
        $region33: #{tpu_custom_call.1} parent=23 // pred_check
          %p212 = pneg %p168
        $region34: #{tpu_custom_call.1} parent=23 // pred_check_branch
          %214 = sbr.rel (%p212) target = $region36
        $region35: #{tpu_custom_call.1} parent=23 // pred_region
          %v215 = vld [vmem:[#allocation2] sm:$0xff]
          %v216 = vld [vmem:[#allocation2 + $0x8] sm:$0xff]
          %v217 = vmul.f32 %v215, 0.25
          %v218 = vmul.f32 %v216, 0.25
          %219 = vst.msk [vmem:[%s164] sm:$0xff] %vm193, %v217
          %220 = vst.msk [vmem:[%s164 + $0x8] sm:$0xff] %vm193, %v218
        $region36: #{tpu_custom_call.1} parent=23 // pred_fallthru
          _
        %s221 = sand.u32 %s77, 1
        %s222 = scalar_lea.sflag [#allocation5], %s221
        %s223 = sand.u32 %s77, 1
        %s224 = smul.addr %s223, 16
        %s225 = scalar_lea.vmem [#allocation6], %s224
        // Predicated region
        $region37: #{tpu_custom_call.1} parent=23 // pred_check
          %p226 = pneg %p87
        $region38: #{tpu_custom_call.1} parent=23 // pred_check_branch
          %228 = sbr.rel (%p226) target = $region40
        $region39: #{tpu_custom_call.1} parent=23 // pred_region
          %s229 = smul.u32 2, %s24
          %s231 = ssub.s32 256, 256
          %232 = vsyncadd %s222, %s231
          %s233 = smul.addr %s23, 2
          %s234 = sadd.s32 %s229, %s233
          %s235 = smul.addr %s234, 128
          %s236 = scalar_lea.hbm %s1, %s235
          %s237 = sshll.u32 %s225, 4
          %s238 = int_to_ptr.vmem [resolvable:$true] %s237
          %243 = dma.vmem_to_hbm [thread:$0]  %s238, 256, %s236, %s222, 128, 128, 8
        $region40: #{tpu_custom_call.1} parent=23 // pred_fallthru
          _
      $region24: #{tpu_custom_call.1} parent=5 // pred_fallthru
        _
      %p244 = scmp.le.s32.totalorder 2, %s13
      // Predicated region
      $region41: #{tpu_custom_call.1} parent=5 // pred_check
        %p245 = pneg %p244
      $region42: #{tpu_custom_call.1} parent=5 // pred_check_branch
        %247 = sbr.rel (%p245) target = $region44
      $region43: #{tpu_custom_call.1} parent=5 // pred_region
        %s248 = ssub.s32 %s13, 2
        // Predicated region
        $region45: #{tpu_custom_call.1} parent=43 // pred_check
          %p249 = pneg %p93
        $region46: #{tpu_custom_call.1} parent=43 // pred_check_branch
          %251 = sbr.rel (%p249) target = $region48
        $region47: #{tpu_custom_call.1} parent=43 // pred_region
          %s252 = sand.u32 %s78, 1
          %s253 = scalar_lea.sflag [#allocation5], %s252
          %s254 = sand.u32 %s78, 1
          %s255 = smul.addr %s254, 16
          %s256 = scalar_lea.vmem [#allocation6], %s255
          %257 = dma.done %s253, 256
        $region48: #{tpu_custom_call.1} parent=43 // pred_fallthru
          _
      $region44: #{tpu_custom_call.1} parent=5 // pred_fallthru
        _
    $region6: #{tpu_custom_call.1} parent=1 // loop_footer
      %s17 = sadd.s32 1, %s13
    $region7: #{tpu_custom_call.1} parent=1 // loop_footer_branch
      %12 = sbr.rel target = $region3
    $region8: #{tpu_custom_call.1} parent=1 // loop_exit
      _
    %258 = vsyncpa [#allocation4], 1
    %s259 = scalar_lea.sflag [#allocation4], 1
    %260 = vsyncpa %s259, 1
    %261 = vsyncpa [#allocation5], 1
    %s262 = scalar_lea.sflag [#allocation5], 1
    %263 = vsyncpa %s262, 1

</llo_original>
